<compile_context>
chip_gen: v6e
topology: v6e:2x2x1
jax: 0.10.0
libtpu: 0.0.40
codegen_flags: <defaults>
</compile_context>

<pallas_src>
import jax
import jax.numpy as jnp
from jax.experimental import pallas as pl
from jax.experimental.pallas import tpu as pltpu


def value_net_kernel(x_ref, w1_ref, b1_ref, w2_ref, b2_ref, w3_ref, b3_ref, o_ref):
    # x: (TB, in+act)  ->  hg1: (TB, 2H)  ->  hg2: (TB, 2H)  ->  out: (TB, 1)
    x = x_ref[...]
    # Fused layer 1: block-diag([w1, wa1]) gives [relu(fc1(s)) | relu(fc1_action(a))]
    hg1 = jnp.maximum(
        jnp.dot(x, w1_ref[...], preferred_element_type=jnp.float32) + b1_ref[...], 0.0)
    # Fused layer 2: block-diag([w2, wa2]) gives [relu(fc2(h1)) | relu(fc2_action(g1))]
    hg2 = jnp.maximum(
        jnp.dot(hg1, w2_ref[...], preferred_element_type=jnp.float32) + b2_ref[...], 0.0)
    # fc3 (N=1): VPU multiply + lane reduce instead of an MXU matmul.
    # w3_ref is [w3^T | w3^T], so sum over lanes == (h2 + g2) @ w3.
    logit = jnp.sum(hg2 * w3_ref[...], axis=-1, keepdims=True) + b3_ref[...]
    o_ref[...] = jnp.tanh(logit).astype(o_ref.dtype)


def value_network_forward(states, actions, fused, *, block_batch=512):
    """states: (B, input_size), actions: (B, action_size), fused: pack_fused_params()."""
    B = states.shape[0]
    x = jnp.concatenate([states.astype(jnp.float32),
                         actions.astype(jnp.float32)], axis=-1)
    F = x.shape[1]
    H2 = fused["w1f"].shape[1]

    # Batch tile: 512 rows amortizes per-step overhead and pipelines activation DMAs;
    # small batches are rounded up to a sublane multiple of 8.
    tb = block_batch if B >= block_batch else ((B + 7) // 8) * 8
    b_pad = ((B + tb - 1) // tb) * tb
    if b_pad != B:
        x = jnp.pad(x, ((0, b_pad - B), (0, 0)))
    grid = (b_pad // tb,)

    weight_args = (fused["w1f"], fused["b1f"], fused["w2f"], fused["b2f"],
                   fused["w3row"], fused["b3"])
    # Constant index_map -> weights stay resident in VMEM across grid steps.
    weight_specs = [pl.BlockSpec(w.shape, lambda i: (0, 0)) for w in weight_args]

    flops = b_pad * (2 * F * H2 + 2 * H2 * H2 + 2 * H2)
    bytes_accessed = 4 * (b_pad * F + b_pad * 1 + sum(int(w.size) for w in weight_args))

    out = pl.pallas_call(
        value_net_kernel,
        out_shape=jax.ShapeDtypeStruct((b_pad, 1), jnp.float32),
        grid=grid,
        in_specs=[pl.BlockSpec((tb, F), lambda i: (i, 0))] + weight_specs,
        out_specs=pl.BlockSpec((tb, 1), lambda i: (i, 0)),
        compiler_params=pltpu.CompilerParams(
            dimension_semantics=("parallel",)),
        cost_estimate=pl.CostEstimate(flops=flops,
                                      transcendentals=b_pad,
                                      bytes_accessed=bytes_accessed),
    )(x, *weight_args)
    return out[:B]


def init_params(key, input_size, hidden_size, action_size):
    """Deterministic init mimicking PyTorch Linear's U(-1/sqrt(fan_in), 1/sqrt(fan_in)).
    Weights stored as (in, out); biases as (1, out)."""
    def linear(k, fan_in, fan_out):
        kw, kb = jax.random.split(k)
        bound = 1.0 / jnp.sqrt(jnp.float32(fan_in))
        w = jax.random.uniform(kw, (fan_in, fan_out), jnp.float32, -bound, bound)
        b = jax.random.uniform(kb, (1, fan_out), jnp.float32, -bound, bound)
        return w, b

    keys = jax.random.split(key, 5)
    w1, b1 = linear(keys[0], input_size, hidden_size)      # fc1
    w2, b2 = linear(keys[1], hidden_size, hidden_size)     # fc2
    wa1, ba1 = linear(keys[2], action_size, hidden_size)   # fc1_action
    wa2, ba2 = linear(keys[3], hidden_size, hidden_size)   # fc2_action
    w3, b3 = linear(keys[4], hidden_size, 1)               # fc3
    return dict(w1=w1, b1=b1, w2=w2, b2=b2,
                wa1=wa1, ba1=ba1, wa2=wa2, ba2=ba2,
                w3=w3, b3=b3)


def pack_fused_params(p, input_size, hidden_size, action_size):
    """Pack the two branches into block-diagonal weights (done once, outside the kernel)."""
    H = hidden_size
    z_sh = jnp.zeros((input_size, H), jnp.float32)
    z_ah = jnp.zeros((action_size, H), jnp.float32)
    z_hh = jnp.zeros((H, H), jnp.float32)
    w1f = jnp.concatenate([jnp.concatenate([p["w1"], z_sh], axis=1),
                           jnp.concatenate([z_ah, p["wa1"]], axis=1)], axis=0)   # (in+act, 2H)
    b1f = jnp.concatenate([p["b1"], p["ba1"]], axis=1)                            # (1, 2H)
    w2f = jnp.concatenate([jnp.concatenate([p["w2"], z_hh], axis=1),
                           jnp.concatenate([z_hh, p["wa2"]], axis=1)], axis=0)   # (2H, 2H)
    b2f = jnp.concatenate([p["b2"], p["ba2"]], axis=1)                            # (1, 2H)
    w3row = jnp.concatenate([p["w3"].T, p["w3"].T], axis=1)                       # (1, 2H)
    return dict(w1f=w1f, b1f=b1f, w2f=w2f, b2f=b2f, w3row=w3row, b3=p["b3"])


def reference_forward(states, actions, p):
    h1 = jax.nn.relu(states @ p["w1"] + p["b1"])
    h2 = jax.nn.relu(h1 @ p["w2"] + p["b2"])
    g1 = jax.nn.relu(actions @ p["wa1"] + p["ba1"])
    g2 = jax.nn.relu(g1 @ p["wa2"] + p["ba2"])
    return jnp.tanh((h2 + g2) @ p["w3"] + p["b3"])


if __name__ == "__main__":
    input_size, hidden_size, action_size = 16, 32, 8

    root = jax.random.PRNGKey(0)
    k_params, k_s, k_a, k_s2, k_a2 = jax.random.split(root, 5)

    raw = init_params(k_params, input_size, hidden_size, action_size)
    fused = pack_fused_params(raw, input_size, hidden_size, action_size)

    # Small batch (typical unit-test size).
    B = 8
    states = jax.random.normal(k_s, (B, input_size), jnp.float32)
    actions = jax.random.normal(k_a, (B, action_size), jnp.float32)
    out = jax.block_until_ready(value_network_forward(states, actions, fused))
    ref = reference_forward(states, actions, raw)
    assert out.shape == (B, 1)
    assert jnp.allclose(out, ref, atol=2e-5, rtol=2e-5)

    # Larger non-multiple batch: exercises the batch grid, padding, and slice-back.
    B2 = 777
    states2 = jax.random.normal(k_s2, (B2, input_size), jnp.float32)
    actions2 = jax.random.normal(k_a2, (B2, action_size), jnp.float32)
    out2 = jax.block_until_ready(value_network_forward(states2, actions2, fused))
    ref2 = reference_forward(states2, actions2, raw)
    assert out2.shape == (B2, 1)
    assert jnp.allclose(out2, ref2, atol=2e-5, rtol=2e-5)

    print("KERNEL_OK")
</pallas_src>

<mosaic_0001>
module attributes {stable_mosaic.version = 11 : i64} {
  func.func @value_net_kernel(%arg0: i32, %arg1: memref<8x24xf32, #tpu.memory_space<vmem>>, %arg2: memref<24x64xf32, #tpu.memory_space<vmem>>, %arg3: memref<1x64xf32, #tpu.memory_space<vmem>>, %arg4: memref<64x64xf32, #tpu.memory_space<vmem>>, %arg5: memref<1x64xf32, #tpu.memory_space<vmem>>, %arg6: memref<1x64xf32, #tpu.memory_space<vmem>>, %arg7: memref<1x1xf32, #tpu.memory_space<vmem>>, %arg8: memref<8x1xf32, #tpu.memory_space<vmem>>) attributes {dimension_semantics = [#tpu.dimension_semantics<parallel>], iteration_bounds = array<i64: 1>, scalar_prefetch = 0 : i64, scratch_operands = 0 : i64, tpu.core_type = #tpu.core_type<tc>, window_params = [{transform_indices = @transform_0, window_bounds = array<i64: 8, 24>}, {pipeline_mode = #tpu.pipeline_mode<synchronous>, transform_indices = @transform_1, window_bounds = array<i64: 24, 64>}, {pipeline_mode = #tpu.pipeline_mode<synchronous>, transform_indices = @transform_2, window_bounds = array<i64: 1, 64>}, {pipeline_mode = #tpu.pipeline_mode<synchronous>, transform_indices = @transform_3, window_bounds = array<i64: 64, 64>}, {pipeline_mode = #tpu.pipeline_mode<synchronous>, transform_indices = @transform_4, window_bounds = array<i64: 1, 64>}, {pipeline_mode = #tpu.pipeline_mode<synchronous>, transform_indices = @transform_5, window_bounds = array<i64: 1, 64>}, {pipeline_mode = #tpu.pipeline_mode<synchronous>, transform_indices = @transform_6, window_bounds = array<i64: 1, 1>}, {transform_indices = @transform_7, window_bounds = array<i64: 8, 1>}]} {
    %c0 = arith.constant 0 : index
    %c0_0 = arith.constant 0 : index
    %0 = vector.load %arg1[%c0, %c0_0] : memref<8x24xf32, #tpu.memory_space<vmem>>, vector<8x24xf32>
    %c0_1 = arith.constant 0 : index
    %c0_2 = arith.constant 0 : index
    %1 = vector.load %arg2[%c0_1, %c0_2] : memref<24x64xf32, #tpu.memory_space<vmem>>, vector<24x64xf32>
    %cst = arith.constant dense<0.000000e+00> : vector<8x64xf32>
    %2 = tpu.matmul %0, %1, %cst {dimension_numbers = #tpu.dot_dimension_numbers<[1], [0], [0], [1], [0, 0, 1, 1], [], []>} : vector<8x24xf32>, vector<24x64xf32>, vector<8x64xf32> -> vector<8x64xf32>
    %c0_3 = arith.constant 0 : index
    %c0_4 = arith.constant 0 : index
    %3 = vector.load %arg3[%c0_3, %c0_4] : memref<1x64xf32, #tpu.memory_space<vmem>>, vector<1x64xf32>
    %4 = vector.broadcast %3 : vector<1x64xf32> to vector<8x64xf32>
    %5 = arith.addf %2, %4 : vector<8x64xf32>
    %cst_5 = arith.constant 0.000000e+00 : f32
    %6 = vector.broadcast %cst_5 : f32 to vector<8x64xf32>
    %7 = arith.maximumf %5, %6 : vector<8x64xf32>
    %c0_6 = arith.constant 0 : index
    %c0_7 = arith.constant 0 : index
    %8 = vector.load %arg4[%c0_6, %c0_7] : memref<64x64xf32, #tpu.memory_space<vmem>>, vector<64x64xf32>
    %cst_8 = arith.constant dense<0.000000e+00> : vector<8x64xf32>
    %9 = tpu.matmul %7, %8, %cst_8 {dimension_numbers = #tpu.dot_dimension_numbers<[1], [0], [0], [1], [0, 0, 1, 1], [], []>} : vector<8x64xf32>, vector<64x64xf32>, vector<8x64xf32> -> vector<8x64xf32>
    %c0_9 = arith.constant 0 : index
    %c0_10 = arith.constant 0 : index
    %10 = vector.load %arg5[%c0_9, %c0_10] : memref<1x64xf32, #tpu.memory_space<vmem>>, vector<1x64xf32>
    %11 = vector.broadcast %10 : vector<1x64xf32> to vector<8x64xf32>
    %12 = arith.addf %9, %11 : vector<8x64xf32>
    %cst_11 = arith.constant 0.000000e+00 : f32
    %13 = vector.broadcast %cst_11 : f32 to vector<8x64xf32>
    %14 = arith.maximumf %12, %13 : vector<8x64xf32>
    %c0_12 = arith.constant 0 : index
    %c0_13 = arith.constant 0 : index
    %15 = vector.load %arg6[%c0_12, %c0_13] : memref<1x64xf32, #tpu.memory_space<vmem>>, vector<1x64xf32>
    %16 = vector.broadcast %15 : vector<1x64xf32> to vector<8x64xf32>
    %17 = arith.mulf %14, %16 : vector<8x64xf32>
    %cst_14 = arith.constant dense<0.000000e+00> : vector<8xf32>
    %18 = vector.multi_reduction <add>, %17, %cst_14 [1] : vector<8x64xf32> to vector<8xf32>
    %19 = vector.shape_cast %18 : vector<8xf32> to vector<8x1xf32>
    %c0_15 = arith.constant 0 : index
    %c0_16 = arith.constant 0 : index
    %20 = vector.load %arg7[%c0_15, %c0_16] : memref<1x1xf32, #tpu.memory_space<vmem>>, vector<1x1xf32>
    %21 = vector.broadcast %20 : vector<1x1xf32> to vector<8x1xf32>
    %22 = arith.addf %19, %21 : vector<8x1xf32>
    %23 = math.tanh %22 : vector<8x1xf32>
    %c0_17 = arith.constant 0 : index
    %c0_18 = arith.constant 0 : index
    %24 = vector.load %arg8[%c0_17, %c0_18] : memref<8x1xf32, #tpu.memory_space<vmem>>, vector<8x1xf32>
    tpu.vector_store %arg8[%c0_17, %c0_18], %23 {strides = array<i32>} : memref<8x1xf32, #tpu.memory_space<vmem>>, vector<8x1xf32>,
    return
  }
  func.func @transform_0(%arg0: i32) -> (i32, i32) {
    %c0_i32 = arith.constant 0 : i32
    %c0_i32_0 = arith.constant 0 : i32
    return %arg0, %c0_i32 : i32, i32
  }
  func.func @transform_1(%arg0: i32) -> (i32, i32) {
    %c0_i32 = arith.constant 0 : i32
    %c0_i32_0 = arith.constant 0 : i32
    %c0_i32_1 = arith.constant 0 : i32
    return %c0_i32, %c0_i32_0 : i32, i32
  }
  func.func @transform_2(%arg0: i32) -> (i32, i32) {
    %c0_i32 = arith.constant 0 : i32
    %c0_i32_0 = arith.constant 0 : i32
    %c0_i32_1 = arith.constant 0 : i32
    return %c0_i32, %c0_i32_0 : i32, i32
  }
  func.func @transform_3(%arg0: i32) -> (i32, i32) {
    %c0_i32 = arith.constant 0 : i32
    %c0_i32_0 = arith.constant 0 : i32
    %c0_i32_1 = arith.constant 0 : i32
    return %c0_i32, %c0_i32_0 : i32, i32
  }
  func.func @transform_4(%arg0: i32) -> (i32, i32) {
    %c0_i32 = arith.constant 0 : i32
    %c0_i32_0 = arith.constant 0 : i32
    %c0_i32_1 = arith.constant 0 : i32
    return %c0_i32, %c0_i32_0 : i32, i32
  }
  func.func @transform_5(%arg0: i32) -> (i32, i32) {
    %c0_i32 = arith.constant 0 : i32
    %c0_i32_0 = arith.constant 0 : i32
    %c0_i32_1 = arith.constant 0 : i32
    return %c0_i32, %c0_i32_0 : i32, i32
  }
  func.func @transform_6(%arg0: i32) -> (i32, i32) {
    %c0_i32 = arith.constant 0 : i32
    %c0_i32_0 = arith.constant 0 : i32
    %c0_i32_1 = arith.constant 0 : i32
    return %c0_i32, %c0_i32_0 : i32, i32
  }
  func.func @transform_7(%arg0: i32) -> (i32, i32) {
    %c0_i32 = arith.constant 0 : i32
    %c0_i32_0 = arith.constant 0 : i32
    return %arg0, %c0_i32 : i32, i32
  }
}

</mosaic_0001>

<llo_original>
// kernel: tpu_custom_call.1
$region0: #{tpu_custom_call.1}
  #allocation0 [shape = 'u32[]', space=smem, size = 0x4, offset = 0x4, fixed_abs, tag = 'smem constant byte address 0x4 - core index']
  #allocation1 [shape = 'u32[144,128]{1,0:T(1,128)}', space=vmem, size = 0x12000, scoped, tag = 'internal scratch']
  #allocation2 [shape = 'f32[1,1]{1,0:T(1,128)S(1)}', space=vmem, size = 0x200, scoped, tag = 'scoped memory for tpu_custom_call.1']
  %s0 = inlined_call_operand.hbm [shape: f32[8,24], index: 0, kind: input, shape index: {}]
  %s1 = inlined_call_operand.hbm [shape: f32[24,64], index: 1, kind: input, shape index: {}]
  %s2 = inlined_call_operand.vmem [shape: f32[1,64], index: 2, kind: input, shape index: {}]
  %s3 = inlined_call_operand.hbm [shape: f32[64,64], index: 3, kind: input, shape index: {}]
  %s4 = inlined_call_operand.vmem [shape: f32[1,64], index: 4, kind: input, shape index: {}]
  %s5 = inlined_call_operand.vmem [shape: f32[1,64], index: 5, kind: input, shape index: {}]
  %s6 = inlined_call_operand.<no memory space> [shape: f32[1,1], index: 6, kind: input, shape index: {}]
  %s7 = inlined_call_operand.vmem [shape: f32[8,1], index: 7, kind: output, shape index: {}]
  %s8 = sld [smem:[#allocation0]]
  $region50: #{tpu_custom_call.1} parent=0
    _
  %s10 = ssub.s32 1, %s8
  %s11 = scalar_select 0, %s10, %s8
  %v12 = vstv %s6
  %13 = vst [vmem:[#allocation2] sm:$0x1] %v12
  $region1: #{tpu_custom_call.1} parent=0
    #allocation3 [shape = 'u8[4096]{0}', space=vmem, size = 0x1000, scoped, tag = 'input window, operand 0, single buffered']
    #allocation4 [shape = 's32[1]{0}', space=sflag, size = 0x4, scoped, tag = 'scoped memory for tpu_custom_call.1']
    #allocation5 [shape = 'u8[12288]{0}', space=vmem, size = 0x3000, scoped, tag = 'input window, operand 1, single buffered']
    #allocation6 [shape = 's32[1]{0}', space=sflag, size = 0x4, scoped, tag = 'scoped memory for tpu_custom_call.1']
    #allocation7 [shape = 'u8[32768]{0}', space=vmem, size = 0x8000, scoped, tag = 'input window, operand 3, single buffered']
    %14 = vsyncpa [#allocation4], 0
    %15 = vsyncpa [#allocation6], 0
    // Predicated region
    $region2: #{tpu_custom_call.1} parent=1 // pred_check
      _
    $region3: #{tpu_custom_call.1} parent=1 // pred_check_branch
      %17 = sbr.rel (0) target = $region5
    $region4: #{tpu_custom_call.1} parent=1 // pred_region
      %s19 = ssub.s32 128, 128
      %20 = vsyncadd [#allocation4], %s19
      %s22 = sshll.u32 [#allocation3], 4
      %s23 = int_to_ptr.vmem [resolvable:$true] %s22
      %25 = dma.hbm_to_vmem [thread:$0]  %s0, 128, %s23, [#allocation4]
    $region5: #{tpu_custom_call.1} parent=1 // pred_fallthru
      _
    // Predicated region
    $region6: #{tpu_custom_call.1} parent=1 // pred_check
      _
    $region7: #{tpu_custom_call.1} parent=1 // pred_check_branch
      %27 = sbr.rel (0) target = $region9
    $region8: #{tpu_custom_call.1} parent=1 // pred_region
      %s29 = ssub.s32 384, 384
      %30 = vsyncadd [#allocation6], %s29
      %s31 = sshll.u32 [#allocation5], 4
      %s32 = int_to_ptr.vmem [resolvable:$true] %s31
      %37 = dma.hbm_to_vmem [thread:$0]  %s1, 384, %s32, [#allocation6], 128, 128, 8
    $region9: #{tpu_custom_call.1} parent=1 // pred_fallthru
      _
    // Predicated region
    $region10: #{tpu_custom_call.1} parent=1 // pred_check
      _
    $region11: #{tpu_custom_call.1} parent=1 // pred_check_branch
      %39 = sbr.rel (0) target = $region13
    $region12: #{tpu_custom_call.1} parent=1 // pred_region
      _
    $region13: #{tpu_custom_call.1} parent=1 // pred_fallthru
      _
    // Predicated region
    $region14: #{tpu_custom_call.1} parent=1 // pred_check
      _
    $region15: #{tpu_custom_call.1} parent=1 // pred_check_branch
      %41 = sbr.rel (0) target = $region17
    $region16: #{tpu_custom_call.1} parent=1 // pred_region
      %s43 = ssub.s32 1024, 1024
      %44 = vsyncadd [#allocation6], %s43
      %s45 = sshll.u32 [#allocation7], 4
      %s46 = int_to_ptr.vmem [resolvable:$true] %s45
      %51 = dma.hbm_to_vmem [thread:$0]  %s3, 1024, %s46, [#allocation6], 128, 128, 8
    $region17: #{tpu_custom_call.1} parent=1 // pred_fallthru
      _
    // Predicated region
    $region18: #{tpu_custom_call.1} parent=1 // pred_check
      _
    $region19: #{tpu_custom_call.1} parent=1 // pred_check_branch
      %53 = sbr.rel (0) target = $region21
    $region20: #{tpu_custom_call.1} parent=1 // pred_region
      _
    $region21: #{tpu_custom_call.1} parent=1 // pred_fallthru
      _
    // Predicated region
    $region22: #{tpu_custom_call.1} parent=1 // pred_check
      _
    $region23: #{tpu_custom_call.1} parent=1 // pred_check_branch
      %55 = sbr.rel (0) target = $region25
    $region24: #{tpu_custom_call.1} parent=1 // pred_region
      _
    $region25: #{tpu_custom_call.1} parent=1 // pred_fallthru
      _
    // Predicated region
    $region26: #{tpu_custom_call.1} parent=1 // pred_check
      _
    $region27: #{tpu_custom_call.1} parent=1 // pred_check_branch
      %57 = sbr.rel (0) target = $region29
    $region28: #{tpu_custom_call.1} parent=1 // pred_region
      _
    $region29: #{tpu_custom_call.1} parent=1 // pred_fallthru
      _
    // Predicated region
    $region30: #{tpu_custom_call.1} parent=1 // pred_check
      _
    $region31: #{tpu_custom_call.1} parent=1 // pred_check_branch
      %59 = sbr.rel (0) target = $region33
    $region32: #{tpu_custom_call.1} parent=1 // pred_region
      %60 = dma.done [#allocation4], 128
    $region33: #{tpu_custom_call.1} parent=1 // pred_fallthru
      _
    // Predicated region
    $region34: #{tpu_custom_call.1} parent=1 // pred_check
      _
    $region35: #{tpu_custom_call.1} parent=1 // pred_check_branch
      %62 = sbr.rel (0) target = $region37
    $region36: #{tpu_custom_call.1} parent=1 // pred_region
      %63 = dma.done [#allocation6], 384
    $region37: #{tpu_custom_call.1} parent=1 // pred_fallthru
      _
    // Predicated region
    $region38: #{tpu_custom_call.1} parent=1 // pred_check
      _
    $region39: #{tpu_custom_call.1} parent=1 // pred_check_branch
      %65 = sbr.rel (0) target = $region41
    $region40: #{tpu_custom_call.1} parent=1 // pred_region
      %66 = dma.done [#allocation6], 1024
    $region41: #{tpu_custom_call.1} parent=1 // pred_fallthru
      _
    %v67 = vld [vmem:[#allocation3] sm:$0xff]
    %v68 = vld [vmem:[#allocation5] sm:$0xff]
    %v69 = vld [vmem:[#allocation5 + $0x8] sm:$0xff]
    %v70 = vld [vmem:[#allocation5 + $0x10] sm:$0xff]
    %v71 = vld [vmem:[%s2] sm:$0x1]
    %v73 = vlaneseq
    %v74 = vshrl.u32 %v73, 7
    %v75 = vsub.s32 0, %v74
    %v76 = vrot.slane %v71, %v75
    %vm78 = vcmask 195584
    %v80 = vsel %vm78, %v67, 0
    %82 = vmatprep.subr.mxu0 0.0
    %83 = vmatpush1.msra.mxu0 0.0
    %84 = vmatprep.subr.mxu0 0.0
    %85 = vmatpush1.msra.mxu0 0.0
    %86 = vmatprep.subr.mxu0 0.0
    %87 = vmatpush1.msra.mxu0 0.0
    %88 = vmatprep.subr.mxu0 0.0
    %89 = vmatpush1.msra.mxu0 0.0
    %90 = vmatprep.subr.mxu0 0.0
    %91 = vmatpush1.msra.mxu0 0.0
    %92 = vmatprep.subr.mxu0 0.0
    %93 = vmatpush1.msra.mxu0 0.0
    %94 = vmatprep.subr.mxu0 0.0
    %95 = vmatpush1.msra.mxu0 0.0
    %96 = vmatprep.subr.mxu0 0.0
    %97 = vmatpush1.msra.mxu0 0.0
    %98 = vmatprep.subr.mxu0 0.0
    %99 = vmatpush1.msra.mxu0 0.0
    %100 = vmatprep.subr.mxu0 0.0
    %101 = vmatpush1.msra.mxu0 0.0
    %102 = vmatprep.subr.mxu0 0.0
    %103 = vmatpush1.msra.mxu0 0.0
    %104 = vmatprep.subr.mxu0 0.0
    %105 = vmatpush1.msra.mxu0 0.0
    %106 = vmatprep.subr.mxu0 0.0
    %107 = vmatpush1.msra.mxu0 0.0
    %108 = vmatprep.subr.mxu0 0.0
    %109 = vmatpush1.msra.mxu0 %v70
    %110 = vmatprep.subr.mxu0 0.0
    %111 = vmatpush1.msra.mxu0 %v69
    %112 = vmatprep.subr.mxu0 0.0
    %113 = vmatpush1.msra.mxu0 %v68
    %114 = vmatprep.subr.mxu0 0.0
    %115 = vmatpush2.msra.mxu0 0.0
    %116 = vmatprep.subr.mxu0 0.0
    %117 = vmatpush2.msra.mxu0 0.0
    %118 = vmatprep.subr.mxu0 0.0
    %119 = vmatpush2.msra.mxu0 0.0
    %120 = vmatprep.subr.mxu0 0.0
    %121 = vmatpush2.msra.mxu0 0.0
    %122 = vmatprep.subr.mxu0 0.0
    %123 = vmatpush2.msra.mxu0 0.0
    %124 = vmatprep.subr.mxu0 0.0
    %125 = vmatpush2.msra.mxu0 0.0
    %126 = vmatprep.subr.mxu0 0.0
    %127 = vmatpush2.msra.mxu0 0.0
    %128 = vmatprep.subr.mxu0 0.0
    %129 = vmatpush2.msra.mxu0 0.0
    %130 = vmatprep.subr.mxu0 0.0
    %131 = vmatpush2.msra.mxu0 0.0
    %132 = vmatprep.subr.mxu0 0.0
    %133 = vmatpush2.msra.mxu0 0.0
    %134 = vmatprep.subr.mxu0 0.0
    %135 = vmatpush2.msra.mxu0 0.0
    %136 = vmatprep.subr.mxu0 0.0
    %137 = vmatpush2.msra.mxu0 0.0
    %138 = vmatprep.subr.mxu0 0.0
    %139 = vmatpush2.msra.mxu0 0.0
    %140 = vmatprep.subr.mxu0 0.0
    %141 = vmatpush2.msra.mxu0 0.0
    %142 = vmatprep.subr.mxu0 0.0
    %143 = vmatpush2.msra.mxu0 0.0
    %144 = vmatprep.subr.mxu0 0.0
    %145 = vmatpush2.msra.mxu0 0.0
    %146 = vmatprep.mubr.f32.mxu0 0.0
    %147 = vmatmul.mubr.f32.gmra.mxu0 %v80
    %v148 = vpop.f32.mrf.mxu0
    %v149 = vadd.f32 %v76, %v148
    %v150 = vpop.f32.mrf.mxu0
    %151 = vdwg.mxu0
    %v152 = vmax.f32 %v149, 0.0
    %v153 = vld [vmem:[#allocation7] sm:$0xff]
    %v154 = vld [vmem:[#allocation7 + $0x8] sm:$0xff]
    %v155 = vld [vmem:[#allocation7 + $0x10] sm:$0xff]
    %v156 = vld [vmem:[#allocation7 + $0x18] sm:$0xff]
    %v157 = vld [vmem:[#allocation7 + $0x20] sm:$0xff]
    %v158 = vld [vmem:[#allocation7 + $0x28] sm:$0xff]
    %v159 = vld [vmem:[#allocation7 + $0x30] sm:$0xff]
    %v160 = vld [vmem:[#allocation7 + $0x38] sm:$0xff]
    %v161 = vld [vmem:[%s4] sm:$0x1]
    %v163 = vlaneseq
    %v164 = vshrl.u32 %v163, 7
    %v165 = vsub.s32 0, %v164
    %v166 = vrot.slane %v161, %v165
    %vm168 = vcmask 523264
    %v170 = vsel %vm168, %v152, 0
    %172 = vmatprep.subr.mxu0 0.0
    %173 = vmatpush1.msra.mxu0 0.0
    %174 = vmatprep.subr.mxu0 0.0
    %175 = vmatpush1.msra.mxu0 0.0
    %176 = vmatprep.subr.mxu0 0.0
    %177 = vmatpush1.msra.mxu0 0.0
    %178 = vmatprep.subr.mxu0 0.0
    %179 = vmatpush1.msra.mxu0 0.0
    %180 = vmatprep.subr.mxu0 0.0
    %181 = vmatpush1.msra.mxu0 0.0
    %182 = vmatprep.subr.mxu0 0.0
    %183 = vmatpush1.msra.mxu0 0.0
    %184 = vmatprep.subr.mxu0 0.0
    %185 = vmatpush1.msra.mxu0 0.0
    %186 = vmatprep.subr.mxu0 0.0
    %187 = vmatpush1.msra.mxu0 0.0
    %188 = vmatprep.subr.mxu0 0.0
    %189 = vmatpush1.msra.mxu0 %v160
    %190 = vmatprep.subr.mxu0 0.0
    %191 = vmatpush1.msra.mxu0 %v159
    %192 = vmatprep.subr.mxu0 0.0
    %193 = vmatpush1.msra.mxu0 %v158
    %194 = vmatprep.subr.mxu0 0.0
    %195 = vmatpush1.msra.mxu0 %v157
    %196 = vmatprep.subr.mxu0 0.0
    %197 = vmatpush1.msra.mxu0 %v156
    %198 = vmatprep.subr.mxu0 0.0
    %199 = vmatpush1.msra.mxu0 %v155
    %200 = vmatprep.subr.mxu0 0.0
    %201 = vmatpush1.msra.mxu0 %v154
    %202 = vmatprep.subr.mxu0 0.0
    %203 = vmatpush1.msra.mxu0 %v153
    %204 = vmatprep.subr.mxu0 0.0
    %205 = vmatpush2.msra.mxu0 0.0
    %206 = vmatprep.subr.mxu0 0.0
    %207 = vmatpush2.msra.mxu0 0.0
    %208 = vmatprep.subr.mxu0 0.0
    %209 = vmatpush2.msra.mxu0 0.0
    %210 = vmatprep.subr.mxu0 0.0
    %211 = vmatpush2.msra.mxu0 0.0
    %212 = vmatprep.subr.mxu0 0.0
    %213 = vmatpush2.msra.mxu0 0.0
    %214 = vmatprep.subr.mxu0 0.0
    %215 = vmatpush2.msra.mxu0 0.0
    %216 = vmatprep.subr.mxu0 0.0
    %217 = vmatpush2.msra.mxu0 0.0
    %218 = vmatprep.subr.mxu0 0.0
    %219 = vmatpush2.msra.mxu0 0.0
    %220 = vmatprep.subr.mxu0 0.0
    %221 = vmatpush2.msra.mxu0 0.0
    %222 = vmatprep.subr.mxu0 0.0
    %223 = vmatpush2.msra.mxu0 0.0
    %224 = vmatprep.subr.mxu0 0.0
    %225 = vmatpush2.msra.mxu0 0.0
    %226 = vmatprep.subr.mxu0 0.0
    %227 = vmatpush2.msra.mxu0 0.0
    %228 = vmatprep.subr.mxu0 0.0
    %229 = vmatpush2.msra.mxu0 0.0
    %230 = vmatprep.subr.mxu0 0.0
    %231 = vmatpush2.msra.mxu0 0.0
    %232 = vmatprep.subr.mxu0 0.0
    %233 = vmatpush2.msra.mxu0 0.0
    %234 = vmatprep.subr.mxu0 0.0
    %235 = vmatpush2.msra.mxu0 0.0
    %236 = vmatprep.mubr.f32.mxu0 0.0
    %237 = vmatmul.mubr.f32.gmra.mxu0 %v170
    %v238 = vpop.f32.mrf.mxu0
    %v239 = vadd.f32 %v166, %v238
    %v240 = vpop.f32.mrf.mxu0
    %241 = vdwg.mxu0
    %v242 = vmax.f32 %v239, 0.0
    %v243 = vld [vmem:[%s5] sm:$0x1]
    %v245 = vlaneseq
    %v246 = vshrl.u32 %v245, 7
    %v247 = vsub.s32 0, %v246
    %v248 = vrot.slane %v243, %v247
    %v250 = vmul.f32 %v242, %v248
    %v251 = vsel %vm168, %v250, 0.0
    %252 = vadd.xlane.f32.xlu0 %v251
    %v253 = vpop.xlane.xlu0 %252
    %v254 = vld [vmem:[#allocation2] sm:$0x1]
    %v256 = vlaneseq
    %v257 = vshrl.u32 %v256, 7
    %v258 = vsub.s32 0, %v257
    %v259 = vrot.slane %v254, %v258
    %v261 = vadd.f32 %v253, %v259
    %v262 = vtanh.pop %v261
    %vm263 = vcmask 7168
    %264 = vst.msk [vmem:[%s7] sm:$0xff] %vm263, %v262
    // Predicated region
    $region42: #{tpu_custom_call.1} parent=1 // pred_check
      _
    $region43: #{tpu_custom_call.1} parent=1 // pred_check_branch
      %266 = sbr.rel (0) target = $region45
    $region44: #{tpu_custom_call.1} parent=1 // pred_region
      _
    $region45: #{tpu_custom_call.1} parent=1 // pred_fallthru
      _
    // Predicated region
    $region46: #{tpu_custom_call.1} parent=1 // pred_check
      _
    $region47: #{tpu_custom_call.1} parent=1 // pred_check_branch
      %268 = sbr.rel (0) target = $region49
    $region48: #{tpu_custom_call.1} parent=1 // pred_region
      _
    $region49: #{tpu_custom_call.1} parent=1 // pred_fallthru
      _
    %269 = vsyncpa [#allocation4], 1
    %270 = vsyncpa [#allocation6], 1

</llo_original>
